<compile_context>
chip_gen: v7x
topology: tpu7x:2x2x1
jax: 0.10.0
libtpu: 0.0.40
codegen_flags: <defaults>
</compile_context>

<pallas_src>
import jax
import jax.numpy as jnp
from jax.experimental import pallas as pl
from jax.experimental.pallas import tpu as pltpu


def _sigmoidal_kernel(x_ref, o_ref):
    # (1 - e^{-x}) / (1 + e^{-x}) == tanh(x / 2); tanh is the numerically
    # safe form (no overflow for large negative x) and is a single EUP op.
    x = x_ref[...].astype(jnp.float32)
    o_ref[...] = jnp.tanh(x * 0.5).astype(o_ref.dtype)


def _choose_rows_tiling(n_rows: int, lane: int, min_sublane: int):
    """Pick (tile_rows, grid_steps) for a (n_rows, lane) slab.

    Targets ~2 MiB (f32-equivalent) tiles; uses a ragged last block (cdiv)
    instead of searching for an exact divisor; tries to give >= 4 grid steps
    for megacore sharding when the array is big enough.
    """
    target_rows = max(min_sublane, (2 * 1024 * 1024) // (lane * 4))
    target_rows = (target_rows // min_sublane) * min_sublane
    if target_rows >= n_rows:
        # Single block covering the whole array (a full-extent block is
        # always a legal BlockSpec, even if n_rows isn't a multiple of 8/16).
        return n_rows, 1
    # Aim for >= 4 grid steps (>= 2 per TensorCore on v7x).
    quarter = -(-n_rows // 4)
    quarter = max(min_sublane, -(-quarter // min_sublane) * min_sublane)
    tile_rows = min(target_rows, quarter)
    return tile_rows, pl.cdiv(n_rows, tile_rows)


def _choose_lane(n: int, min_sublane: int):
    """Widest lane-dense last dim that divides n exactly (prefer >= min_sublane
    rows so the slab fills full vregs); returns None if no 128-multiple divides."""
    candidates = (2048, 1024, 512, 256, 128)
    for cand in candidates:
        if n % cand == 0 and n // cand >= min_sublane:
            return cand
    for cand in candidates:
        if n % cand == 0:
            return cand
    return None


def sigmoidal(x: jax.Array, *, in_place: bool = False) -> jax.Array:
    """Elementwise sigmoidal activation (tanh(x/2)) via a Pallas TPU kernel.

    Works for any shape/dtype. `in_place=True` aliases the output onto the
    input HBM buffer (only use if the caller no longer needs `x`).
    """
    orig_shape = x.shape
    dtype = x.dtype
    n = x.size
    if n == 0:
        return x

    itemsize = x.dtype.itemsize
    # Minimum legal sublane tile: 8 rows for 32-bit, 16 for bf16, 32 for 8-bit.
    min_sublane = max(8, 32 // max(1, itemsize))

    lane = _choose_lane(n, min_sublane)

    if lane is not None:
        x2d = x.reshape(n // lane, lane)       # pure view/bitcast, no copy
        pad_tail = 0
    else:
        # Rare fallback: pad once to a (min_sublane, 128)-aligned slab.
        lane = 128
        unit = min_sublane * lane
        n_pad = -(-n // unit) * unit
        pad_tail = n_pad - n
        x2d = jnp.pad(x.reshape(-1), (0, pad_tail)).reshape(n_pad // lane, lane)

    rows = x2d.shape[0]
    tile_rows, grid_steps = _choose_rows_tiling(rows, lane, min_sublane)

    out2d = pl.pallas_call(
        _sigmoidal_kernel,
        out_shape=jax.ShapeDtypeStruct((rows, lane), dtype),
        grid_spec=pltpu.PrefetchScalarGridSpec(
            num_scalar_prefetch=0,
            grid=(grid_steps,),
            in_specs=[pl.BlockSpec((tile_rows, lane), lambda i: (i, 0))],
            out_specs=pl.BlockSpec((tile_rows, lane), lambda i: (i, 0)),
        ),
        compiler_params=pltpu.CompilerParams(
            dimension_semantics=("parallel",)),
        input_output_aliases=({0: 0} if in_place else {}),
    )(x2d)

    if pad_tail:
        out2d = out2d.reshape(-1)[:n]
    return out2d.reshape(orig_shape)


def _reference(x):
    # Same formula as the PyTorch module (valid for non-overflowing x).
    z = jnp.exp(-x.astype(jnp.float32))
    return ((1.0 - z) / (1.0 + z)).astype(x.dtype)


if __name__ == "__main__":
    key = jax.random.PRNGKey(0)
    k1, k2, k3 = jax.random.split(key, 3)

    # Main example at the module's implied NCHW shape (no-padding fast path).
    x1 = jax.random.normal(k1, (2, 4, 16, 16), dtype=jnp.float32)
    y1 = sigmoidal(x1)
    jax.block_until_ready(y1)
    assert y1.shape == x1.shape and y1.dtype == x1.dtype
    assert jnp.allclose(y1, _reference(x1), atol=1e-6, rtol=1e-6)

    # Odd size -> exercises the padding fallback path.
    x2 = jax.random.normal(k2, (3, 5, 7), dtype=jnp.float32)
    y2 = sigmoidal(x2)
    jax.block_until_ready(y2)
    assert y2.shape == x2.shape and y2.dtype == x2.dtype
    assert jnp.allclose(y2, _reference(x2), atol=1e-6, rtol=1e-6)

    # Larger input -> exercises the multi-step (tiled, ragged-safe) grid.
    x3 = jax.random.normal(k3, (16, 64, 32, 32), dtype=jnp.float32)
    y3 = sigmoidal(x3)
    jax.block_until_ready(y3)
    assert y3.shape == x3.shape and y3.dtype == x3.dtype
    assert jnp.allclose(y3, _reference(x3), atol=1e-6, rtol=1e-6)

    print("KERNEL_OK")
</pallas_src>

<mosaic_0001>
module attributes {stable_mosaic.version = 11 : i64} {
  func.func @_sigmoidal_kernel(%arg0: i32, %arg1: memref<8x256xf32, #tpu.memory_space<vmem>>, %arg2: memref<8x256xf32, #tpu.memory_space<vmem>>) attributes {dimension_semantics = [#tpu.dimension_semantics<parallel>], iteration_bounds = array<i64: 1>, scalar_prefetch = 0 : i64, scratch_operands = 0 : i64, tpu.core_type = #tpu.core_type<tc>, window_params = [{transform_indices = @transform_0, window_bounds = array<i64: 8, 256>}, {transform_indices = @transform_1, window_bounds = array<i64: 8, 256>}]} {
    %c0 = arith.constant 0 : index
    %c0_0 = arith.constant 0 : index
    %0 = vector.load %arg1[%c0, %c0_0] : memref<8x256xf32, #tpu.memory_space<vmem>>, vector<8x256xf32>
    %cst = arith.constant 5.000000e-01 : f32
    %1 = vector.broadcast %cst : f32 to vector<8x256xf32>
    %2 = arith.mulf %0, %1 : vector<8x256xf32>
    %3 = math.tanh %2 : vector<8x256xf32>
    %c0_1 = arith.constant 0 : index
    %c0_2 = arith.constant 0 : index
    %4 = vector.load %arg2[%c0_1, %c0_2] : memref<8x256xf32, #tpu.memory_space<vmem>>, vector<8x256xf32>
    tpu.vector_store %arg2[%c0_1, %c0_2], %3 {strides = array<i32>} : memref<8x256xf32, #tpu.memory_space<vmem>>, vector<8x256xf32>,
    return
  }
  func.func @transform_0(%arg0: i32) -> (i32, i32) {
    %c0_i32 = arith.constant 0 : i32
    %c0_i32_0 = arith.constant 0 : i32
    return %arg0, %c0_i32 : i32, i32
  }
  func.func @transform_1(%arg0: i32) -> (i32, i32) {
    %c0_i32 = arith.constant 0 : i32
    %c0_i32_0 = arith.constant 0 : i32
    return %arg0, %c0_i32 : i32, i32
  }
}

</mosaic_0001>

<llo_original>
// kernel: tpu_custom_call.1
$region0: #{tpu_custom_call.1}
  #allocation0 [shape = 'u32[]', space=smem, size = 0x4, offset = 0x4, fixed_abs, tag = 'smem constant byte address 0x4 - core index']
  #allocation1 [shape = 'u32[144,128]{1,0:T(1,128)}', space=vmem, size = 0x12000, scoped, tag = 'internal scratch']
  %s0 = inlined_call_operand.hbm [shape: f32[8,256], index: 0, kind: input, shape index: {}]
  %s1 = inlined_call_operand.hbm [shape: f32[8,256], index: 1, kind: output, shape index: {}]
  %s2 = sld [smem:[#allocation0]]
  $region18: #{tpu_custom_call.1} parent=0
    _
  %s4 = ssub.s32 1, %s2
  %s5 = scalar_select 0, %s4, %s2
  $region1: #{tpu_custom_call.1} parent=0
    #allocation2 [shape = 'u8[8192]{0}', space=vmem, size = 0x2000, scoped, tag = 'input window, operand 0, single buffered']
    #allocation3 [shape = 's32[1]{0}', space=sflag, size = 0x4, scoped, tag = 'scoped memory for tpu_custom_call.1']
    #allocation4 [shape = 's32[1]{0}', space=sflag, size = 0x4, scoped, tag = 'scoped memory for tpu_custom_call.1']
    #allocation5 [shape = 'u8[8192]{0}', space=vmem, size = 0x2000, scoped, tag = 'output window, operand 0, single buffered']
    %6 = vsyncpa [#allocation3], 0
    %7 = vsyncpa [#allocation4], 0
    // Predicated region
    $region2: #{tpu_custom_call.1} parent=1 // pred_check
      _
    $region3: #{tpu_custom_call.1} parent=1 // pred_check_branch
      %9 = sbr.rel (0) target = $region5
    $region4: #{tpu_custom_call.1} parent=1 // pred_region
      %s11 = ssub.s32 256, 256
      %12 = vsyncadd [#allocation3], %s11
      %s14 = sshll.u32 [#allocation2], 4
      %s15 = int_to_ptr.vmem [resolvable:$true] %s14
      %17 = dma.hbm_to_vmem [thread:$0]  %s0, 256, %s15, [#allocation3]
    $region5: #{tpu_custom_call.1} parent=1 // pred_fallthru
      _
    // Predicated region
    $region6: #{tpu_custom_call.1} parent=1 // pred_check
      _
    $region7: #{tpu_custom_call.1} parent=1 // pred_check_branch
      %19 = sbr.rel (0) target = $region9
    $region8: #{tpu_custom_call.1} parent=1 // pred_region
      %20 = dma.done [#allocation3], 256
    $region9: #{tpu_custom_call.1} parent=1 // pred_fallthru
      _
    %v21 = vld [vmem:[#allocation2] sm:$0xff]
    %v22 = vld [vmem:[#allocation2 + $0x8] sm:$0xff]
    %v23 = vmul.f32 %v21, 0.5
    %v24 = vmul.f32 %v22, 0.5
    %v25 = vtanh.pop %v23
    %v26 = vtanh.pop %v24
    %27 = vst [vmem:[#allocation5] sm:$0xff] %v25
    %28 = vst [vmem:[#allocation5 + $0x8] sm:$0xff] %v26
    // Predicated region
    $region10: #{tpu_custom_call.1} parent=1 // pred_check
      _
    $region11: #{tpu_custom_call.1} parent=1 // pred_check_branch
      %30 = sbr.rel (0) target = $region13
    $region12: #{tpu_custom_call.1} parent=1 // pred_region
      %s32 = ssub.s32 256, 256
      %33 = vsyncadd [#allocation4], %s32
      %s35 = sshll.u32 [#allocation5], 4
      %s36 = int_to_ptr.vmem [resolvable:$true] %s35
      %38 = dma.vmem_to_hbm [thread:$0]  %s36, 256, %s1, [#allocation4]
    $region13: #{tpu_custom_call.1} parent=1 // pred_fallthru
      _
    // Predicated region
    $region14: #{tpu_custom_call.1} parent=1 // pred_check
      _
    $region15: #{tpu_custom_call.1} parent=1 // pred_check_branch
      %40 = sbr.rel (0) target = $region17
    $region16: #{tpu_custom_call.1} parent=1 // pred_region
      %41 = dma.done [#allocation4], 256
    $region17: #{tpu_custom_call.1} parent=1 // pred_fallthru
      _
    %42 = vsyncpa [#allocation3], 1
    %43 = vsyncpa [#allocation4], 1

</llo_original>
